<compile_context>
chip_gen: v5e
topology: v5e:2x2
jax: 0.10.0
libtpu: 0.0.40
codegen_flags: <defaults>
</compile_context>

<pallas_src>
import jax
import jax.numpy as jnp
from jax import lax
from jax.experimental import pallas as pl
from jax.experimental.pallas import tpu as pltpu


def _mlp_kernel(x_ref, w1_ref, b1_ref, w2_ref, b2_ref, w3t_ref, b3_ref, o_ref):
    # x tile arrives as f32 straight from HBM; cast to bf16 here (free — VPU
    # has huge slack) so the matmuls run at the bf16 MXU rate.
    x = x_ref[...].astype(jnp.bfloat16)
    h1 = jnp.dot(x, w1_ref[...], preferred_element_type=jnp.float32) + b1_ref[...]
    h1 = jnp.maximum(h1, 0.0).astype(jnp.bfloat16)                     # ReLU (f32 math)
    h2 = jnp.dot(h1, w2_ref[...], preferred_element_type=jnp.float32) + b2_ref[...]
    h2 = jnp.maximum(h2, 0.0).astype(jnp.bfloat16)                     # ReLU (f32 math)
    # Head: (1,64) @ (tb,64)^T -> (1,tb).  Packs the per-row scalar outputs
    # densely into lanes, so the HBM store is tb*4 bytes instead of tb*512.
    z = lax.dot_general(
        w3t_ref[...], h2,
        dimension_numbers=(((1,), (1,)), ((), ())),
        preferred_element_type=jnp.float32,
    ) + b3_ref[...]
    # sigmoid(z) = 0.5 * tanh(0.5 * z) + 0.5   (exact, stable, EUP slot)
    o_ref[...] = 0.5 * jnp.tanh(0.5 * z) + 0.5


def _choose_batch_tile(batch, in_dim):
    """Batch-tile rows: multiple of 256 (v6e/v7x MXU, also 128 for v5e),
    >=2 tiles for batch>256 (two v7x TensorCores), capped by VMEM."""
    if batch <= 256:
        return max(8, -(-batch // 8) * 8)            # single tile, 8-sublane granule
    g = 256
    # Keep the f32 x double-buffer (2 * tb * in_dim * 4 B) under ~24 MiB (v7x).
    cap = max(g, ((24 << 20) // (8 * in_dim)) // g * g)
    # ceil(batch/2) rounded up to the granule -> at least 2 tiles.
    half = -(-batch // (2 * g)) * g
    return max(g, min(2048, cap, half))


def _forward_impl(x2d, w1b, b1, w2b, b2, w3t, b3, tb, num_tiles, single_buffer_weights):
    padded, in_dim = x2d.shape

    if single_buffer_weights:
        # Weight block index never changes across the grid -> single buffer
        # halves pinned-weight VMEM with zero DMA cost.
        def pinned(shape):
            return pl.BlockSpec(shape, lambda i: (0, 0), pipeline_mode=pl.Buffered(1))
        weight_bufs = 1
    else:
        def pinned(shape):
            return pl.BlockSpec(shape, lambda i: (0, 0))
        weight_bufs = 2

    w_bytes = (w1b.size + w2b.size + w3t.size) * 2 + (b1.size + b2.size + b3.size) * 4
    vmem_need = (2 * tb * in_dim * 4          # x tile double-buffer (f32)
                 + 2 * tb * 4                 # output tile double-buffer (f32)
                 + weight_bufs * w_bytes      # pinned weights / biases
                 + (4 << 20))                 # headroom: activations / compiler scratch
    vmem_limit = int(min(max(vmem_need, 32 << 20), 64 << 20))

    return pl.pallas_call(
        _mlp_kernel,
        out_shape=jax.ShapeDtypeStruct((1, padded), jnp.float32),
        grid=(num_tiles,),
        in_specs=[
            pl.BlockSpec((tb, in_dim), lambda i: (i, 0)),   # x batch tile (f32)
            pinned(w1b.shape), pinned(b1.shape),            # layer 1
            pinned(w2b.shape), pinned(b2.shape),            # layer 2
            pinned(w3t.shape), pinned(b3.shape),            # head (row vector)
        ],
        out_specs=pl.BlockSpec((1, tb), lambda i: (0, i)),  # lane-packed scalars
        compiler_params=pltpu.CompilerParams(
            dimension_semantics=("parallel",),
            vmem_limit_bytes=vmem_limit,
        ),
    )(x2d, w1b, b1, w2b, b2, w3t, b3)


def neural_network_forward(x, params):
    """x: [batch, *dims] float32. Returns [batch, 1] float32."""
    w1, b1, w2, b2, w3, b3 = params
    batch = x.shape[0]
    x2d = x.reshape(batch, -1)                              # nn.Flatten
    in_dim = x2d.shape[1]
    assert w1.shape[0] == in_dim

    tb = _choose_batch_tile(batch, in_dim)
    num_tiles = pl.cdiv(batch, tb)
    padded = num_tiles * tb
    if padded != batch:                                     # only for ragged batches
        x2d = jnp.pad(x2d, ((0, padded - batch), (0, 0)))

    # Weight casts are tiny one-off passes (in a real model the params would
    # already be stored in bf16); x itself is NOT cast in the wrapper.
    w1b = w1.astype(jnp.bfloat16)
    w2b = w2.astype(jnp.bfloat16)
    w3t = w3.T.astype(jnp.bfloat16)                         # (1, 64) row vector

    args = (x2d, w1b, b1, w2b, b2, w3t, b3, tb, num_tiles)
    try:
        out = _forward_impl(*args, single_buffer_weights=True)
    except Exception:
        # pl.Buffered(1) not supported by this jax version -> default buffering.
        out = _forward_impl(*args, single_buffer_weights=False)

    return out[0, :batch].reshape(batch, 1)


def init_params(input_size, key):
    """Deterministic synthetic parameters, PyTorch-default-like uniform init.
    Weights stored as [in_features, out_features] (already transposed for x @ W)."""
    dims = [(input_size, 128), (128, 64), (64, 1)]
    params = []
    for fan_in, fan_out in dims:
        key, kw, kb = jax.random.split(key, 3)
        bound = 1.0 / jnp.sqrt(fan_in)
        w = jax.random.uniform(kw, (fan_in, fan_out), jnp.float32, -bound, bound)
        b = jax.random.uniform(kb, (1, fan_out), jnp.float32, -bound, bound)
        params.extend([w, b])
    return tuple(params)


def reference_forward(x, params):
    w1, b1, w2, b2, w3, b3 = params
    x2d = x.reshape(x.shape[0], -1).astype(jnp.float32)
    h1 = jnp.maximum(x2d @ w1 + b1, 0.0)
    h2 = jnp.maximum(h1 @ w2 + b2, 0.0)
    return jax.nn.sigmoid(h2 @ w3 + b3)


if __name__ == "__main__":
    key = jax.random.PRNGKey(0)
    k_x, k_p = jax.random.split(key)

    # Small example: batch=8, (4, 16) input -> 64 flattened features.
    batch, c, w = 8, 4, 16
    input_size = c * w
    x = jax.random.normal(k_x, (batch, c, w), jnp.float32)
    params = init_params(input_size, k_p)

    y = jax.block_until_ready(neural_network_forward(x, params))
    y_ref = reference_forward(x, params)
    assert y.shape == (batch, 1)
    # bf16 matmul path vs f32 reference: loose absolute tolerance on [0,1] outputs.
    assert jnp.allclose(y, y_ref, atol=2e-2), float(jnp.max(jnp.abs(y - y_ref)))

    # Exercise the multi-tile (lane-packed output, parallel grid) path as well.
    x_big = jax.random.normal(jax.random.fold_in(k_x, 1), (512, c, w), jnp.float32)
    y_big = jax.block_until_ready(neural_network_forward(x_big, params))
    y_big_ref = reference_forward(x_big, params)
    assert y_big.shape == (512, 1)
    assert jnp.allclose(y_big, y_big_ref, atol=2e-2), float(jnp.max(jnp.abs(y_big - y_big_ref)))

    print("KERNEL_OK")
</pallas_src>

<mosaic_0001>
module attributes {stable_mosaic.version = 11 : i64} {
  func.func @_mlp_kernel(%arg0: i32, %arg1: memref<8x64xf32, #tpu.memory_space<vmem>>, %arg2: memref<64x128xbf16, #tpu.memory_space<vmem>>, %arg3: memref<1x128xf32, #tpu.memory_space<vmem>>, %arg4: memref<128x64xbf16, #tpu.memory_space<vmem>>, %arg5: memref<1x64xf32, #tpu.memory_space<vmem>>, %arg6: memref<1x64xbf16, #tpu.memory_space<vmem>>, %arg7: memref<1x1xf32, #tpu.memory_space<vmem>>, %arg8: memref<1x8xf32, #tpu.memory_space<vmem>>) attributes {dimension_semantics = [#tpu.dimension_semantics<parallel>], iteration_bounds = array<i64: 1>, scalar_prefetch = 0 : i64, scratch_operands = 0 : i64, tpu.core_type = #tpu.core_type<tc>, window_params = [{transform_indices = @transform_0, window_bounds = array<i64: 8, 64>}, {pipeline_mode = #tpu.pipeline_mode<synchronous>, transform_indices = @transform_1, window_bounds = array<i64: 64, 128>}, {pipeline_mode = #tpu.pipeline_mode<synchronous>, transform_indices = @transform_2, window_bounds = array<i64: 1, 128>}, {pipeline_mode = #tpu.pipeline_mode<synchronous>, transform_indices = @transform_3, window_bounds = array<i64: 128, 64>}, {pipeline_mode = #tpu.pipeline_mode<synchronous>, transform_indices = @transform_4, window_bounds = array<i64: 1, 64>}, {pipeline_mode = #tpu.pipeline_mode<synchronous>, transform_indices = @transform_5, window_bounds = array<i64: 1, 64>}, {pipeline_mode = #tpu.pipeline_mode<synchronous>, transform_indices = @transform_6, window_bounds = array<i64: 1, 1>}, {transform_indices = @transform_7, window_bounds = array<i64: 1, 8>}]} {
    %c0 = arith.constant 0 : index
    %c0_0 = arith.constant 0 : index
    %0 = vector.load %arg1[%c0, %c0_0] : memref<8x64xf32, #tpu.memory_space<vmem>>, vector<8x64xf32>
    %1 = arith.truncf %0 : vector<8x64xf32> to vector<8x64xbf16>
    %c0_1 = arith.constant 0 : index
    %c0_2 = arith.constant 0 : index
    %2 = vector.load %arg2[%c0_1, %c0_2] : memref<64x128xbf16, #tpu.memory_space<vmem>>, vector<64x128xbf16>
    %cst = arith.constant dense<0.000000e+00> : vector<8x128xf32>
    %3 = tpu.matmul %1, %2, %cst {dimension_numbers = #tpu.dot_dimension_numbers<[1], [0], [0], [1], [0, 0, 1, 1], [], []>} : vector<8x64xbf16>, vector<64x128xbf16>, vector<8x128xf32> -> vector<8x128xf32>
    %c0_3 = arith.constant 0 : index
    %c0_4 = arith.constant 0 : index
    %4 = vector.load %arg3[%c0_3, %c0_4] : memref<1x128xf32, #tpu.memory_space<vmem>>, vector<1x128xf32>
    %5 = vector.broadcast %4 : vector<1x128xf32> to vector<8x128xf32>
    %6 = arith.addf %3, %5 : vector<8x128xf32>
    %cst_5 = arith.constant 0.000000e+00 : f32
    %7 = vector.broadcast %cst_5 : f32 to vector<8x128xf32>
    %8 = arith.maximumf %6, %7 : vector<8x128xf32>
    %9 = arith.truncf %8 : vector<8x128xf32> to vector<8x128xbf16>
    %c0_6 = arith.constant 0 : index
    %c0_7 = arith.constant 0 : index
    %10 = vector.load %arg4[%c0_6, %c0_7] : memref<128x64xbf16, #tpu.memory_space<vmem>>, vector<128x64xbf16>
    %cst_8 = arith.constant dense<0.000000e+00> : vector<8x64xf32>
    %11 = tpu.matmul %9, %10, %cst_8 {dimension_numbers = #tpu.dot_dimension_numbers<[1], [0], [0], [1], [0, 0, 1, 1], [], []>} : vector<8x128xbf16>, vector<128x64xbf16>, vector<8x64xf32> -> vector<8x64xf32>
    %c0_9 = arith.constant 0 : index
    %c0_10 = arith.constant 0 : index
    %12 = vector.load %arg5[%c0_9, %c0_10] : memref<1x64xf32, #tpu.memory_space<vmem>>, vector<1x64xf32>
    %13 = vector.broadcast %12 : vector<1x64xf32> to vector<8x64xf32>
    %14 = arith.addf %11, %13 : vector<8x64xf32>
    %cst_11 = arith.constant 0.000000e+00 : f32
    %15 = vector.broadcast %cst_11 : f32 to vector<8x64xf32>
    %16 = arith.maximumf %14, %15 : vector<8x64xf32>
    %17 = arith.truncf %16 : vector<8x64xf32> to vector<8x64xbf16>
    %c0_12 = arith.constant 0 : index
    %c0_13 = arith.constant 0 : index
    %18 = vector.load %arg6[%c0_12, %c0_13] : memref<1x64xbf16, #tpu.memory_space<vmem>>, vector<1x64xbf16>
    %cst_14 = arith.constant dense<0.000000e+00> : vector<1x8xf32>
    %19 = tpu.matmul %18, %17, %cst_14 {dimension_numbers = #tpu.dot_dimension_numbers<[1], [1], [0], [0], [0, 0, 1, 0], [], []>} : vector<1x64xbf16>, vector<8x64xbf16>, vector<1x8xf32> -> vector<1x8xf32>
    %c0_15 = arith.constant 0 : index
    %c0_16 = arith.constant 0 : index
    %20 = vector.load %arg7[%c0_15, %c0_16] : memref<1x1xf32, #tpu.memory_space<vmem>>, vector<1x1xf32>
    %21 = vector.broadcast %20 : vector<1x1xf32> to vector<1x8xf32>
    %22 = arith.addf %19, %21 : vector<1x8xf32>
    %cst_17 = arith.constant 5.000000e-01 : f32
    %23 = vector.broadcast %cst_17 : f32 to vector<1x8xf32>
    %24 = arith.mulf %23, %22 : vector<1x8xf32>
    %25 = math.tanh %24 : vector<1x8xf32>
    %cst_18 = arith.constant 5.000000e-01 : f32
    %26 = vector.broadcast %cst_18 : f32 to vector<1x8xf32>
    %27 = arith.mulf %26, %25 : vector<1x8xf32>
    %cst_19 = arith.constant 5.000000e-01 : f32
    %28 = vector.broadcast %cst_19 : f32 to vector<1x8xf32>
    %29 = arith.addf %27, %28 : vector<1x8xf32>
    %c0_20 = arith.constant 0 : index
    %c0_21 = arith.constant 0 : index
    %30 = vector.load %arg8[%c0_20, %c0_21] : memref<1x8xf32, #tpu.memory_space<vmem>>, vector<1x8xf32>
    tpu.vector_store %arg8[%c0_20, %c0_21], %29 {strides = array<i32>} : memref<1x8xf32, #tpu.memory_space<vmem>>, vector<1x8xf32>,
    return
  }
  func.func @transform_0(%arg0: i32) -> (i32, i32) {
    %c0_i32 = arith.constant 0 : i32
    %c0_i32_0 = arith.constant 0 : i32
    return %arg0, %c0_i32 : i32, i32
  }
  func.func @transform_1(%arg0: i32) -> (i32, i32) {
    %c0_i32 = arith.constant 0 : i32
    %c0_i32_0 = arith.constant 0 : i32
    %c0_i32_1 = arith.constant 0 : i32
    return %c0_i32, %c0_i32_0 : i32, i32
  }
  func.func @transform_2(%arg0: i32) -> (i32, i32) {
    %c0_i32 = arith.constant 0 : i32
    %c0_i32_0 = arith.constant 0 : i32
    %c0_i32_1 = arith.constant 0 : i32
    return %c0_i32, %c0_i32_0 : i32, i32
  }
  func.func @transform_3(%arg0: i32) -> (i32, i32) {
    %c0_i32 = arith.constant 0 : i32
    %c0_i32_0 = arith.constant 0 : i32
    %c0_i32_1 = arith.constant 0 : i32
    return %c0_i32, %c0_i32_0 : i32, i32
  }
  func.func @transform_4(%arg0: i32) -> (i32, i32) {
    %c0_i32 = arith.constant 0 : i32
    %c0_i32_0 = arith.constant 0 : i32
    %c0_i32_1 = arith.constant 0 : i32
    return %c0_i32, %c0_i32_0 : i32, i32
  }
  func.func @transform_5(%arg0: i32) -> (i32, i32) {
    %c0_i32 = arith.constant 0 : i32
    %c0_i32_0 = arith.constant 0 : i32
    %c0_i32_1 = arith.constant 0 : i32
    return %c0_i32, %c0_i32_0 : i32, i32
  }
  func.func @transform_6(%arg0: i32) -> (i32, i32) {
    %c0_i32 = arith.constant 0 : i32
    %c0_i32_0 = arith.constant 0 : i32
    %c0_i32_1 = arith.constant 0 : i32
    return %c0_i32, %c0_i32_0 : i32, i32
  }
  func.func @transform_7(%arg0: i32) -> (i32, i32) {
    %c0_i32 = arith.constant 0 : i32
    %c0_i32_0 = arith.constant 0 : i32
    return %c0_i32, %arg0 : i32, i32
  }
}

module attributes {stable_mosaic.version = 11 : i64} {
  func.func @_mlp_kernel(%arg0: i32, %arg1: memref<8x64xf32, #tpu.memory_space<vmem>>, %arg2: memref<64x128xbf16, #tpu.memory_space<vmem>>, %arg3: memref<1x128xf32, #tpu.memory_space<vmem>>, %arg4: memref<128x64xbf16, #tpu.memory_space<vmem>>, %arg5: memref<1x64xf32, #tpu.memory_space<vmem>>, %arg6: memref<1x64xbf16, #tpu.memory_space<vmem>>, %arg7: memref<1x1xf32, #tpu.memory_space<vmem>>, %arg8: memref<1x8xf32, #tpu.memory_space<vmem>>) attributes {dimension_semantics = [#tpu.dimension_semantics<parallel>], iteration_bounds = array<i64: 1>, scalar_prefetch = 0 : i64, scratch_operands = 0 : i64, tpu.core_type = #tpu.core_type<tc>, window_params = [{transform_indices = @transform_0, window_bounds = array<i64: 8, 64>}, {pipeline_mode = #tpu.pipeline_mode<synchronous>, transform_indices = @transform_1, window_bounds = array<i64: 64, 128>}, {pipeline_mode = #tpu.pipeline_mode<synchronous>, transform_indices = @transform_2, window_bounds = array<i64: 1, 128>}, {pipeline_mode = #tpu.pipeline_mode<synchronous>, transform_indices = @transform_3, window_bounds = array<i64: 128, 64>}, {pipeline_mode = #tpu.pipeline_mode<synchronous>, transform_indices = @transform_4, window_bounds = array<i64: 1, 64>}, {pipeline_mode = #tpu.pipeline_mode<synchronous>, transform_indices = @transform_5, window_bounds = array<i64: 1, 64>}, {pipeline_mode = #tpu.pipeline_mode<synchronous>, transform_indices = @transform_6, window_bounds = array<i64: 1, 1>}, {transform_indices = @transform_7, window_bounds = array<i64: 1, 8>}]} {
    %c0 = arith.constant 0 : index
    %c0_0 = arith.constant 0 : index
    %0 = vector.load %arg1[%c0, %c0_0] : memref<8x64xf32, #tpu.memory_space<vmem>>, vector<8x64xf32>
    %1 = arith.truncf %0 : vector<8x64xf32> to vector<8x64xbf16>
    %c0_1 = arith.constant 0 : index
    %c0_2 = arith.constant 0 : index
    %2 = vector.load %arg2[%c0_1, %c0_2] : memref<64x128xbf16, #tpu.memory_space<vmem>>, vector<64x128xbf16>
    %cst = arith.constant dense<0.000000e+00> : vector<8x128xf32>
    %3 = tpu.matmul %1, %2, %cst {dimension_numbers = #tpu.dot_dimension_numbers<[1], [0], [0], [1], [0, 0, 1, 1], [], []>} : vector<8x64xbf16>, vector<64x128xbf16>, vector<8x128xf32> -> vector<8x128xf32>
    %c0_3 = arith.constant 0 : index
    %c0_4 = arith.constant 0 : index
    %4 = vector.load %arg3[%c0_3, %c0_4] : memref<1x128xf32, #tpu.memory_space<vmem>>, vector<1x128xf32>
    %5 = vector.broadcast %4 : vector<1x128xf32> to vector<8x128xf32>
    %6 = arith.addf %3, %5 : vector<8x128xf32>
    %cst_5 = arith.constant 0.000000e+00 : f32
    %7 = vector.broadcast %cst_5 : f32 to vector<8x128xf32>
    %8 = arith.maximumf %6, %7 : vector<8x128xf32>
    %9 = arith.truncf %8 : vector<8x128xf32> to vector<8x128xbf16>
    %c0_6 = arith.constant 0 : index
    %c0_7 = arith.constant 0 : index
    %10 = vector.load %arg4[%c0_6, %c0_7] : memref<128x64xbf16, #tpu.memory_space<vmem>>, vector<128x64xbf16>
    %cst_8 = arith.constant dense<0.000000e+00> : vector<8x64xf32>
    %11 = tpu.matmul %9, %10, %cst_8 {dimension_numbers = #tpu.dot_dimension_numbers<[1], [0], [0], [1], [0, 0, 1, 1], [], []>} : vector<8x128xbf16>, vector<128x64xbf16>, vector<8x64xf32> -> vector<8x64xf32>
    %c0_9 = arith.constant 0 : index
    %c0_10 = arith.constant 0 : index
    %12 = vector.load %arg5[%c0_9, %c0_10] : memref<1x64xf32, #tpu.memory_space<vmem>>, vector<1x64xf32>
    %13 = vector.broadcast %12 : vector<1x64xf32> to vector<8x64xf32>
    %14 = arith.addf %11, %13 : vector<8x64xf32>
    %cst_11 = arith.constant 0.000000e+00 : f32
    %15 = vector.broadcast %cst_11 : f32 to vector<8x64xf32>
    %16 = arith.maximumf %14, %15 : vector<8x64xf32>
    %17 = arith.truncf %16 : vector<8x64xf32> to vector<8x64xbf16>
    %c0_12 = arith.constant 0 : index
    %c0_13 = arith.constant 0 : index
    %18 = vector.load %arg6[%c0_12, %c0_13] : memref<1x64xbf16, #tpu.memory_space<vmem>>, vector<1x64xbf16>
    %cst_14 = arith.constant dense<0.000000e+00> : vector<1x8xf32>
    %19 = tpu.matmul %18, %17, %cst_14 {dimension_numbers = #tpu.dot_dimension_numbers<[1], [1], [0], [0], [0, 0, 1, 0], [], []>} : vector<1x64xbf16>, vector<8x64xbf16>, vector<1x8xf32> -> vector<1x8xf32>
    %c0_15 = arith.constant 0 : index
    %c0_16 = arith.constant 0 : index
    %20 = vector.load %arg7[%c0_15, %c0_16] : memref<1x1xf32, #tpu.memory_space<vmem>>, vector<1x1xf32>
    %21 = vector.broadcast %20 : vector<1x1xf32> to vector<1x8xf32>
    %22 = arith.addf %19, %21 : vector<1x8xf32>
    %cst_17 = arith.constant 5.000000e-01 : f32
    %23 = vector.broadcast %cst_17 : f32 to vector<1x8xf32>
    %24 = arith.mulf %23, %22 : vector<1x8xf32>
    %25 = math.tanh %24 : vector<1x8xf32>
    %cst_18 = arith.constant 5.000000e-01 : f32
    %26 = vector.broadcast %cst_18 : f32 to vector<1x8xf32>
    %27 = arith.mulf %26, %25 : vector<1x8xf32>
    %cst_19 = arith.constant 5.000000e-01 : f32
    %28 = vector.broadcast %cst_19 : f32 to vector<1x8xf32>
    %29 = arith.addf %27, %28 : vector<1x8xf32>
    %c0_20 = arith.constant 0 : index
    %c0_21 = arith.constant 0 : index
    %30 = vector.load %arg8[%c0_20, %c0_21] : memref<1x8xf32, #tpu.memory_space<vmem>>, vector<1x8xf32>
    tpu.vector_store %arg8[%c0_20, %c0_21], %29 {strides = array<i32>} : memref<1x8xf32, #tpu.memory_space<vmem>>, vector<1x8xf32>,
    return
  }
  func.func @transform_0(%arg0: i32) -> (i32, i32) {
    %c0_i32 = arith.constant 0 : i32
    %c0_i32_0 = arith.constant 0 : i32
    return %arg0, %c0_i32 : i32, i32
  }
  func.func @transform_1(%arg0: i32) -> (i32, i32) {
    %c0_i32 = arith.constant 0 : i32
    %c0_i32_0 = arith.constant 0 : i32
    %c0_i32_1 = arith.constant 0 : i32
    return %c0_i32, %c0_i32_0 : i32, i32
  }
  func.func @transform_2(%arg0: i32) -> (i32, i32) {
    %c0_i32 = arith.constant 0 : i32
    %c0_i32_0 = arith.constant 0 : i32
    %c0_i32_1 = arith.constant 0 : i32
    return %c0_i32, %c0_i32_0 : i32, i32
  }
  func.func @transform_3(%arg0: i32) -> (i32, i32) {
    %c0_i32 = arith.constant 0 : i32
    %c0_i32_0 = arith.constant 0 : i32
    %c0_i32_1 = arith.constant 0 : i32
    return %c0_i32, %c0_i32_0 : i32, i32
  }
  func.func @transform_4(%arg0: i32) -> (i32, i32) {
    %c0_i32 = arith.constant 0 : i32
    %c0_i32_0 = arith.constant 0 : i32
    %c0_i32_1 = arith.constant 0 : i32
    return %c0_i32, %c0_i32_0 : i32, i32
  }
  func.func @transform_5(%arg0: i32) -> (i32, i32) {
    %c0_i32 = arith.constant 0 : i32
    %c0_i32_0 = arith.constant 0 : i32
    %c0_i32_1 = arith.constant 0 : i32
    return %c0_i32, %c0_i32_0 : i32, i32
  }
  func.func @transform_6(%arg0: i32) -> (i32, i32) {
    %c0_i32 = arith.constant 0 : i32
    %c0_i32_0 = arith.constant 0 : i32
    %c0_i32_1 = arith.constant 0 : i32
    return %c0_i32, %c0_i32_0 : i32, i32
  }
  func.func @transform_7(%arg0: i32) -> (i32, i32) {
    %c0_i32 = arith.constant 0 : i32
    %c0_i32_0 = arith.constant 0 : i32
    return %c0_i32, %arg0 : i32, i32
  }
}

</mosaic_0001>

<llo_original>
// kernel: tpu_custom_call.1
$region0: #{tpu_custom_call.1}
  #allocation0 [shape = 'u32[]', space=smem, size = 0x4, offset = 0x4, fixed_abs, tag = 'smem constant byte address 0x4 - core index']
  #allocation1 [shape = 'u32[72,128]{1,0:T(1,128)}', space=vmem, size = 0x9000, scoped, tag = 'internal scratch']
  #allocation2 [shape = 'f32[1,1]{1,0:T(1,128)S(1)}', space=vmem, size = 0x200, scoped, tag = 'scoped memory for tpu_custom_call.1']
  %s0 = inlined_call_operand.vmem [shape: f32[8,64], index: 0, kind: input, shape index: {}]
  %s1 = inlined_call_operand.vmem [shape: bf16[64,128], index: 1, kind: input, shape index: {}]
  %s2 = inlined_call_operand.vmem [shape: f32[1,128], index: 2, kind: input, shape index: {}]
  %s3 = inlined_call_operand.vmem [shape: bf16[128,64], index: 3, kind: input, shape index: {}]
  %s4 = inlined_call_operand.vmem [shape: f32[1,64], index: 4, kind: input, shape index: {}]
  %s5 = inlined_call_operand.vmem [shape: bf16[1,64], index: 5, kind: input, shape index: {}]
  %s6 = inlined_call_operand.<no memory space> [shape: f32[1,1], index: 6, kind: input, shape index: {}]
  %s7 = inlined_call_operand.hbm [shape: f32[1,8], index: 7, kind: output, shape index: {}]
  %s8 = sld [smem:[#allocation0]]
  $region38: #{tpu_custom_call.1} parent=0
    _
  %s10 = ssub.s32 1, %s8
  %s11 = scalar_select 0, %s10, %s8
  %v12 = vstv %s6
  %13 = vst [vmem:[#allocation2] sm:$0x1] %v12
  $region1: #{tpu_custom_call.1} parent=0
    #allocation3 [shape = 'u8[512]{0}', space=vmem, size = 0x400, scoped, tag = 'output window, operand 0, single buffered']
    #allocation4 [shape = 's32[1]{0}', space=sflag, size = 0x4, scoped, tag = 'scoped memory for tpu_custom_call.1']
    %14 = vsyncpa [#allocation4], 0
    // Predicated region
    $region2: #{tpu_custom_call.1} parent=1 // pred_check
      _
    $region3: #{tpu_custom_call.1} parent=1 // pred_check_branch
      %16 = sbr.rel (0) target = $region5
    $region4: #{tpu_custom_call.1} parent=1 // pred_region
      _
    $region5: #{tpu_custom_call.1} parent=1 // pred_fallthru
      _
    // Predicated region
    $region6: #{tpu_custom_call.1} parent=1 // pred_check
      _
    $region7: #{tpu_custom_call.1} parent=1 // pred_check_branch
      %18 = sbr.rel (0) target = $region9
    $region8: #{tpu_custom_call.1} parent=1 // pred_region
      _
    $region9: #{tpu_custom_call.1} parent=1 // pred_fallthru
      _
    // Predicated region
    $region10: #{tpu_custom_call.1} parent=1 // pred_check
      _
    $region11: #{tpu_custom_call.1} parent=1 // pred_check_branch
      %20 = sbr.rel (0) target = $region13
    $region12: #{tpu_custom_call.1} parent=1 // pred_region
      _
    $region13: #{tpu_custom_call.1} parent=1 // pred_fallthru
      _
    // Predicated region
    $region14: #{tpu_custom_call.1} parent=1 // pred_check
      _
    $region15: #{tpu_custom_call.1} parent=1 // pred_check_branch
      %22 = sbr.rel (0) target = $region17
    $region16: #{tpu_custom_call.1} parent=1 // pred_region
      _
    $region17: #{tpu_custom_call.1} parent=1 // pred_fallthru
      _
    // Predicated region
    $region18: #{tpu_custom_call.1} parent=1 // pred_check
      _
    $region19: #{tpu_custom_call.1} parent=1 // pred_check_branch
      %24 = sbr.rel (0) target = $region21
    $region20: #{tpu_custom_call.1} parent=1 // pred_region
      _
    $region21: #{tpu_custom_call.1} parent=1 // pred_fallthru
      _
    // Predicated region
    $region22: #{tpu_custom_call.1} parent=1 // pred_check
      _
    $region23: #{tpu_custom_call.1} parent=1 // pred_check_branch
      %26 = sbr.rel (0) target = $region25
    $region24: #{tpu_custom_call.1} parent=1 // pred_region
      _
    $region25: #{tpu_custom_call.1} parent=1 // pred_fallthru
      _
    // Predicated region
    $region26: #{tpu_custom_call.1} parent=1 // pred_check
      _
    $region27: #{tpu_custom_call.1} parent=1 // pred_check_branch
      %28 = sbr.rel (0) target = $region29
    $region28: #{tpu_custom_call.1} parent=1 // pred_region
      _
    $region29: #{tpu_custom_call.1} parent=1 // pred_fallthru
      _
    %v30 = vld [vmem:[%s0] sm:$0xff]
    %v31 = vpack.c.bf16 %v30, %v30
    %v32 = vld [vmem:[%s1] sm:$0xf]
    %v33 = vld [vmem:[%s1 + $0x4] sm:$0xf]
    %v34 = vld [vmem:[%s1 + $0x8] sm:$0xf]
    %v35 = vld [vmem:[%s1 + $0xc] sm:$0xf]
    %v36 = vld [vmem:[%s1 + $0x10] sm:$0xf]
    %v37 = vld [vmem:[%s1 + $0x14] sm:$0xf]
    %v38 = vld [vmem:[%s1 + $0x18] sm:$0xf]
    %v39 = vld [vmem:[%s1 + $0x1c] sm:$0xf]
    %v40 = vld [vmem:[%s2] sm:$0x1]
    %v42 = vperm.slane %v40, 0
    %v52 = vunpack.c.l.b16 %v32
    %v53 = vunpack.c.l.b16 %v33
    %v54 = vunpack.c.l.b16 %v34
    %v55 = vunpack.c.l.b16 %v35
    %v56 = vunpack.c.l.b16 %v36
    %v57 = vunpack.c.l.b16 %v37
    %v58 = vunpack.c.l.b16 %v38
    %v59 = vunpack.c.l.b16 %v39
    %v60 = vpack.c.b16 %v53, %v52
    %v61 = vpack.c.b16 %v55, %v54
    %v62 = vpack.c.b16 %v57, %v56
    %v63 = vpack.c.b16 %v59, %v58
    %vm68 = vcmask 523264
    %v70 = vsel %vm68, %v31, 0
    %72 = vmatpush.bf16.msra.mxu0 0
    %73 = vmatpush.bf16.msra.mxu0 0
    %74 = vmatpush.bf16.msra.mxu0 0
    %75 = vmatpush.bf16.msra.mxu0 0
    %76 = vmatpush.bf16.msra.mxu0 %v63
    %77 = vmatpush.bf16.msra.mxu0 %v62
    %78 = vmatpush.bf16.msra.mxu0 %v61
    %79 = vmatpush.bf16.msra.mxu0 %v60
    %80 = vmatmul.bf16.gmra.mxu0 %v70
    %v81 = vpop.f32.mrf.mxu0
    %v82 = vadd.f32 %v42, %v81
    %v83 = vpop.f32.mrf.mxu0
    %84 = vdwg.mxu0
    %v85 = vmax.f32 %v82, 0.0
    %v86 = vpack.c.bf16 %v85, %v85
    %v87 = vld [vmem:[%s3] sm:$0xf]
    %v88 = vld [vmem:[%s3 + $0x4] sm:$0xf]
    %v89 = vld [vmem:[%s3 + $0x8] sm:$0xf]
    %v90 = vld [vmem:[%s3 + $0xc] sm:$0xf]
    %v91 = vld [vmem:[%s3 + $0x10] sm:$0xf]
    %v92 = vld [vmem:[%s3 + $0x14] sm:$0xf]
    %v93 = vld [vmem:[%s3 + $0x18] sm:$0xf]
    %v94 = vld [vmem:[%s3 + $0x1c] sm:$0xf]
    %v95 = vld [vmem:[%s3 + $0x20] sm:$0xf]
    %v96 = vld [vmem:[%s3 + $0x24] sm:$0xf]
    %v97 = vld [vmem:[%s3 + $0x28] sm:$0xf]
    %v98 = vld [vmem:[%s3 + $0x2c] sm:$0xf]
    %v99 = vld [vmem:[%s3 + $0x30] sm:$0xf]
    %v100 = vld [vmem:[%s3 + $0x34] sm:$0xf]
    %v101 = vld [vmem:[%s3 + $0x38] sm:$0xf]
    %v102 = vld [vmem:[%s3 + $0x3c] sm:$0xf]
    %v103 = vld [vmem:[%s4] sm:$0x1]
    %v105 = vperm.slane %v103, 0
    %v123 = vunpack.c.l.b16 %v87
    %v124 = vunpack.c.l.b16 %v88
    %v125 = vunpack.c.l.b16 %v89
    %v126 = vunpack.c.l.b16 %v90
    %v127 = vunpack.c.l.b16 %v91
    %v128 = vunpack.c.l.b16 %v92
    %v129 = vunpack.c.l.b16 %v93
    %v130 = vunpack.c.l.b16 %v94
    %v131 = vunpack.c.l.b16 %v95
    %v132 = vunpack.c.l.b16 %v96
    %v133 = vunpack.c.l.b16 %v97
    %v134 = vunpack.c.l.b16 %v98
    %v135 = vunpack.c.l.b16 %v99
    %v136 = vunpack.c.l.b16 %v100
    %v137 = vunpack.c.l.b16 %v101
    %v138 = vunpack.c.l.b16 %v102
    %v139 = vpack.c.b16 %v124, %v123
    %v140 = vpack.c.b16 %v126, %v125
    %v141 = vpack.c.b16 %v128, %v127
    %v142 = vpack.c.b16 %v130, %v129
    %v143 = vpack.c.b16 %v132, %v131
    %v144 = vpack.c.b16 %v134, %v133
    %v145 = vpack.c.b16 %v136, %v135
    %v146 = vpack.c.b16 %v138, %v137
    %155 = vmatpush.bf16.msra.mxu0 %v146
    %156 = vmatpush.bf16.msra.mxu0 %v145
    %157 = vmatpush.bf16.msra.mxu0 %v144
    %158 = vmatpush.bf16.msra.mxu0 %v143
    %159 = vmatpush.bf16.msra.mxu0 %v142
    %160 = vmatpush.bf16.msra.mxu0 %v141
    %161 = vmatpush.bf16.msra.mxu0 %v140
    %162 = vmatpush.bf16.msra.mxu0 %v139
    %163 = vmatmul.bf16.gmra.mxu0 %v86
    %v164 = vpop.f32.mrf.mxu0
    %v165 = vadd.f32 %v105, %v164
    %v166 = vpop.f32.mrf.mxu0
    %167 = vdwg.mxu0
    %v168 = vmax.f32 %v165, 0.0
    %v169 = vpack.c.bf16 %v168, %v168
    %v170 = vld [vmem:[%s5] sm:$0x1]
    %v171 = vld [vmem:[#allocation2] sm:$0x1]
    %173 = vset.pattern.permute.xlu0 0
    %174 = vperm.xlu0 %173, %v171
    %v175 = vpop.permute.xlu0 %174
    %v177 = vperm.slane %v175, 0
    %v179 = vsel %vm68, %v170, 0
    %v182 = vsel %vm68, %v169, 0
    %184 = vmatpush.bf16.xpose.msra.mxu0 0
    %185 = vmatpush.bf16.xpose.msra.mxu0 0
    %186 = vmatpush.bf16.xpose.msra.mxu0 0
    %187 = vmatpush.bf16.xpose.msra.mxu0 0
    %188 = vmatpush.bf16.xpose.msra.mxu0 0
    %189 = vmatpush.bf16.xpose.msra.mxu0 0
    %190 = vmatpush.bf16.xpose.msra.mxu0 0
    %191 = vmatpush.bf16.xpose.msra.mxu0 %v182
    %192 = vmatmul.bf16.gmra.mxu0 %v179
    %v193 = vpop.f32.mrf.mxu0
    %v194 = vadd.f32 %v177, %v193
    %v195 = vpop.f32.mrf.mxu0
    %196 = vdwg.mxu0
    %v197 = vmul.f32 %v194, 0.5
    %v198 = vtanh.pop %v197
    %v199 = vmul.f32 %v198, 0.5
    %v200 = vadd.f32 %v199, 0.5
    %vm201 = vcmask 57344
    %202 = vst.msk [vmem:[#allocation3] sm:$0x1] %vm201, %v200
    // Predicated region
    $region30: #{tpu_custom_call.1} parent=1 // pred_check
      _
    $region31: #{tpu_custom_call.1} parent=1 // pred_check_branch
      %204 = sbr.rel (0) target = $region33
    $region32: #{tpu_custom_call.1} parent=1 // pred_region
      %206 = vsyncadd [#allocation4], 0
      %s208 = sshll.u32 [#allocation3], 4
      %s209 = int_to_ptr.vmem [resolvable:$true] %s208
      %s210 = sshll.u32 %s7, 4
      %s211 = int_to_ptr.hbm [resolvable:$true] %s210
      %213 = dma.vmem_to_hbm [thread:$0]  %s209, 16, %s211, [#allocation4]
    $region33: #{tpu_custom_call.1} parent=1 // pred_fallthru
      _
    // Predicated region
    $region34: #{tpu_custom_call.1} parent=1 // pred_check
      _
    $region35: #{tpu_custom_call.1} parent=1 // pred_check_branch
      %215 = sbr.rel (0) target = $region37
    $region36: #{tpu_custom_call.1} parent=1 // pred_region
      %217 = dma.done [#allocation4], 16
    $region37: #{tpu_custom_call.1} parent=1 // pred_fallthru
      _
    %218 = vsyncpa [#allocation4], 1

// kernel: tpu_custom_call.1
$region0: #{tpu_custom_call.1}
  #allocation0 [shape = 'u32[]', space=smem, size = 0x4, offset = 0x4, fixed_abs, tag = 'smem constant byte address 0x4 - core index']
  #allocation1 [shape = 'u32[72,128]{1,0:T(1,128)}', space=vmem, size = 0x9000, scoped, tag = 'internal scratch']
  #allocation2 [shape = 'f32[1,1]{1,0:T(1,128)S(1)}', space=vmem, size = 0x200, scoped, tag = 'scoped memory for tpu_custom_call.1']
  %s0 = inlined_call_operand.vmem [shape: f32[8,64], index: 0, kind: input, shape index: {}]
  %s1 = inlined_call_operand.vmem [shape: bf16[64,128], index: 1, kind: input, shape index: {}]
  %s2 = inlined_call_operand.vmem [shape: f32[1,128], index: 2, kind: input, shape index: {}]
  %s3 = inlined_call_operand.vmem [shape: bf16[128,64], index: 3, kind: input, shape index: {}]
  %s4 = inlined_call_operand.vmem [shape: f32[1,64], index: 4, kind: input, shape index: {}]
  %s5 = inlined_call_operand.vmem [shape: bf16[1,64], index: 5, kind: input, shape index: {}]
  %s6 = inlined_call_operand.<no memory space> [shape: f32[1,1], index: 6, kind: input, shape index: {}]
  %s7 = inlined_call_operand.hbm [shape: f32[1,8], index: 7, kind: output, shape index: {}]
  %s8 = sld [smem:[#allocation0]]
  $region38: #{tpu_custom_call.1} parent=0
    _
  %s10 = ssub.s32 1, %s8
  %s11 = scalar_select 0, %s10, %s8
  %v12 = vstv %s6
  %13 = vst [vmem:[#allocation2] sm:$0x1] %v12
  $region1: #{tpu_custom_call.1} parent=0
    #allocation3 [shape = 'u8[512]{0}', space=vmem, size = 0x400, scoped, tag = 'output window, operand 0, single buffered']
    #allocation4 [shape = 's32[1]{0}', space=sflag, size = 0x4, scoped, tag = 'scoped memory for tpu_custom_call.1']
    %14 = vsyncpa [#allocation4], 0
    // Predicated region
    $region2: #{tpu_custom_call.1} parent=1 // pred_check
      _
    $region3: #{tpu_custom_call.1} parent=1 // pred_check_branch
      %16 = sbr.rel (0) target = $region5
    $region4: #{tpu_custom_call.1} parent=1 // pred_region
      _
    $region5: #{tpu_custom_call.1} parent=1 // pred_fallthru
      _
    // Predicated region
    $region6: #{tpu_custom_call.1} parent=1 // pred_check
      _
    $region7: #{tpu_custom_call.1} parent=1 // pred_check_branch
      %18 = sbr.rel (0) target = $region9
    $region8: #{tpu_custom_call.1} parent=1 // pred_region
      _
    $region9: #{tpu_custom_call.1} parent=1 // pred_fallthru
      _
    // Predicated region
    $region10: #{tpu_custom_call.1} parent=1 // pred_check
      _
    $region11: #{tpu_custom_call.1} parent=1 // pred_check_branch
      %20 = sbr.rel (0) target = $region13
    $region12: #{tpu_custom_call.1} parent=1 // pred_region
      _
    $region13: #{tpu_custom_call.1} parent=1 // pred_fallthru
      _
    // Predicated region
    $region14: #{tpu_custom_call.1} parent=1 // pred_check
      _
    $region15: #{tpu_custom_call.1} parent=1 // pred_check_branch
      %22 = sbr.rel (0) target = $region17
    $region16: #{tpu_custom_call.1} parent=1 // pred_region
      _
    $region17: #{tpu_custom_call.1} parent=1 // pred_fallthru
      _
    // Predicated region
    $region18: #{tpu_custom_call.1} parent=1 // pred_check
      _
    $region19: #{tpu_custom_call.1} parent=1 // pred_check_branch
      %24 = sbr.rel (0) target = $region21
    $region20: #{tpu_custom_call.1} parent=1 // pred_region
      _
    $region21: #{tpu_custom_call.1} parent=1 // pred_fallthru
      _
    // Predicated region
    $region22: #{tpu_custom_call.1} parent=1 // pred_check
      _
    $region23: #{tpu_custom_call.1} parent=1 // pred_check_branch
      %26 = sbr.rel (0) target = $region25
    $region24: #{tpu_custom_call.1} parent=1 // pred_region
      _
    $region25: #{tpu_custom_call.1} parent=1 // pred_fallthru
      _
    // Predicated region
    $region26: #{tpu_custom_call.1} parent=1 // pred_check
      _
    $region27: #{tpu_custom_call.1} parent=1 // pred_check_branch
      %28 = sbr.rel (0) target = $region29
    $region28: #{tpu_custom_call.1} parent=1 // pred_region
      _
    $region29: #{tpu_custom_call.1} parent=1 // pred_fallthru
      _
    %v30 = vld [vmem:[%s0] sm:$0xff]
    %v31 = vpack.c.bf16 %v30, %v30
    %v32 = vld [vmem:[%s1] sm:$0xf]
    %v33 = vld [vmem:[%s1 + $0x4] sm:$0xf]
    %v34 = vld [vmem:[%s1 + $0x8] sm:$0xf]
    %v35 = vld [vmem:[%s1 + $0xc] sm:$0xf]
    %v36 = vld [vmem:[%s1 + $0x10] sm:$0xf]
    %v37 = vld [vmem:[%s1 + $0x14] sm:$0xf]
    %v38 = vld [vmem:[%s1 + $0x18] sm:$0xf]
    %v39 = vld [vmem:[%s1 + $0x1c] sm:$0xf]
    %v40 = vld [vmem:[%s2] sm:$0x1]
    %v42 = vperm.slane %v40, 0
    %v52 = vunpack.c.l.b16 %v32
    %v53 = vunpack.c.l.b16 %v33
    %v54 = vunpack.c.l.b16 %v34
    %v55 = vunpack.c.l.b16 %v35
    %v56 = vunpack.c.l.b16 %v36
    %v57 = vunpack.c.l.b16 %v37
    %v58 = vunpack.c.l.b16 %v38
    %v59 = vunpack.c.l.b16 %v39
    %v60 = vpack.c.b16 %v53, %v52
    %v61 = vpack.c.b16 %v55, %v54
    %v62 = vpack.c.b16 %v57, %v56
    %v63 = vpack.c.b16 %v59, %v58
    %vm68 = vcmask 523264
    %v70 = vsel %vm68, %v31, 0
    %72 = vmatpush.bf16.msra.mxu0 0
    %73 = vmatpush.bf16.msra.mxu0 0
    %74 = vmatpush.bf16.msra.mxu0 0
    %75 = vmatpush.bf16.msra.mxu0 0
    %76 = vmatpush.bf16.msra.mxu0 %v63
    %77 = vmatpush.bf16.msra.mxu0 %v62
    %78 = vmatpush.bf16.msra.mxu0 %v61
    %79 = vmatpush.bf16.msra.mxu0 %v60
    %80 = vmatmul.bf16.gmra.mxu0 %v70
    %v81 = vpop.f32.mrf.mxu0
    %v82 = vadd.f32 %v42, %v81
    %v83 = vpop.f32.mrf.mxu0
    %84 = vdwg.mxu0
    %v85 = vmax.f32 %v82, 0.0
    %v86 = vpack.c.bf16 %v85, %v85
    %v87 = vld [vmem:[%s3] sm:$0xf]
    %v88 = vld [vmem:[%s3 + $0x4] sm:$0xf]
    %v89 = vld [vmem:[%s3 + $0x8] sm:$0xf]
    %v90 = vld [vmem:[%s3 + $0xc] sm:$0xf]
    %v91 = vld [vmem:[%s3 + $0x10] sm:$0xf]
    %v92 = vld [vmem:[%s3 + $0x14] sm:$0xf]
    %v93 = vld [vmem:[%s3 + $0x18] sm:$0xf]
    %v94 = vld [vmem:[%s3 + $0x1c] sm:$0xf]
    %v95 = vld [vmem:[%s3 + $0x20] sm:$0xf]
    %v96 = vld [vmem:[%s3 + $0x24] sm:$0xf]
    %v97 = vld [vmem:[%s3 + $0x28] sm:$0xf]
    %v98 = vld [vmem:[%s3 + $0x2c] sm:$0xf]
    %v99 = vld [vmem:[%s3 + $0x30] sm:$0xf]
    %v100 = vld [vmem:[%s3 + $0x34] sm:$0xf]
    %v101 = vld [vmem:[%s3 + $0x38] sm:$0xf]
    %v102 = vld [vmem:[%s3 + $0x3c] sm:$0xf]
    %v103 = vld [vmem:[%s4] sm:$0x1]
    %v105 = vperm.slane %v103, 0
    %v123 = vunpack.c.l.b16 %v87
    %v124 = vunpack.c.l.b16 %v88
    %v125 = vunpack.c.l.b16 %v89
    %v126 = vunpack.c.l.b16 %v90
    %v127 = vunpack.c.l.b16 %v91
    %v128 = vunpack.c.l.b16 %v92
    %v129 = vunpack.c.l.b16 %v93
    %v130 = vunpack.c.l.b16 %v94
    %v131 = vunpack.c.l.b16 %v95
    %v132 = vunpack.c.l.b16 %v96
    %v133 = vunpack.c.l.b16 %v97
    %v134 = vunpack.c.l.b16 %v98
    %v135 = vunpack.c.l.b16 %v99
    %v136 = vunpack.c.l.b16 %v100
    %v137 = vunpack.c.l.b16 %v101
    %v138 = vunpack.c.l.b16 %v102
    %v139 = vpack.c.b16 %v124, %v123
    %v140 = vpack.c.b16 %v126, %v125
    %v141 = vpack.c.b16 %v128, %v127
    %v142 = vpack.c.b16 %v130, %v129
    %v143 = vpack.c.b16 %v132, %v131
    %v144 = vpack.c.b16 %v134, %v133
    %v145 = vpack.c.b16 %v136, %v135
    %v146 = vpack.c.b16 %v138, %v137
    %155 = vmatpush.bf16.msra.mxu0 %v146
    %156 = vmatpush.bf16.msra.mxu0 %v145
    %157 = vmatpush.bf16.msra.mxu0 %v144
    %158 = vmatpush.bf16.msra.mxu0 %v143
    %159 = vmatpush.bf16.msra.mxu0 %v142
    %160 = vmatpush.bf16.msra.mxu0 %v141
    %161 = vmatpush.bf16.msra.mxu0 %v140
    %162 = vmatpush.bf16.msra.mxu0 %v139
    %163 = vmatmul.bf16.gmra.mxu0 %v86
    %v164 = vpop.f32.mrf.mxu0
    %v165 = vadd.f32 %v105, %v164
    %v166 = vpop.f32.mrf.mxu0
    %167 = vdwg.mxu0
    %v168 = vmax.f32 %v165, 0.0
    %v169 = vpack.c.bf16 %v168, %v168
    %v170 = vld [vmem:[%s5] sm:$0x1]
    %v171 = vld [vmem:[#allocation2] sm:$0x1]
    %173 = vset.pattern.permute.xlu0 0
    %174 = vperm.xlu0 %173, %v171
    %v175 = vpop.permute.xlu0 %174
    %v177 = vperm.slane %v175, 0
    %v179 = vsel %vm68, %v170, 0
    %v182 = vsel %vm68, %v169, 0
    %184 = vmatpush.bf16.xpose.msra.mxu0 0
    %185 = vmatpush.bf16.xpose.msra.mxu0 0
    %186 = vmatpush.bf16.xpose.msra.mxu0 0
    %187 = vmatpush.bf16.xpose.msra.mxu0 0
    %188 = vmatpush.bf16.xpose.msra.mxu0 0
    %189 = vmatpush.bf16.xpose.msra.mxu0 0
    %190 = vmatpush.bf16.xpose.msra.mxu0 0
    %191 = vmatpush.bf16.xpose.msra.mxu0 %v182
    %192 = vmatmul.bf16.gmra.mxu0 %v179
    %v193 = vpop.f32.mrf.mxu0
    %v194 = vadd.f32 %v177, %v193
    %v195 = vpop.f32.mrf.mxu0
    %196 = vdwg.mxu0
    %v197 = vmul.f32 %v194, 0.5
    %v198 = vtanh.pop %v197
    %v199 = vmul.f32 %v198, 0.5
    %v200 = vadd.f32 %v199, 0.5
    %vm201 = vcmask 57344
    %202 = vst.msk [vmem:[#allocation3] sm:$0x1] %vm201, %v200
    // Predicated region
    $region30: #{tpu_custom_call.1} parent=1 // pred_check
      _
    $region31: #{tpu_custom_call.1} parent=1 // pred_check_branch
      %204 = sbr.rel (0) target = $region33
    $region32: #{tpu_custom_call.1} parent=1 // pred_region
      %206 = vsyncadd [#allocation4], 0
      %s208 = sshll.u32 [#allocation3], 4
      %s209 = int_to_ptr.vmem [resolvable:$true] %s208
      %s210 = sshll.u32 %s7, 4
      %s211 = int_to_ptr.hbm [resolvable:$true] %s210
      %213 = dma.vmem_to_hbm [thread:$0]  %s209, 16, %s211, [#allocation4]
    $region33: #{tpu_custom_call.1} parent=1 // pred_fallthru
      _
    // Predicated region
    $region34: #{tpu_custom_call.1} parent=1 // pred_check
      _
    $region35: #{tpu_custom_call.1} parent=1 // pred_check_branch
      %215 = sbr.rel (0) target = $region37
    $region36: #{tpu_custom_call.1} parent=1 // pred_region
      %217 = dma.done [#allocation4], 16
    $region37: #{tpu_custom_call.1} parent=1 // pred_fallthru
      _
    %218 = vsyncpa [#allocation4], 1

</llo_original>
